<compile_context>
chip_gen: v5e
topology: v5e:2x2
jax: 0.10.0
libtpu: 0.0.40
codegen_flags: <defaults>
</compile_context>

<pallas_src>
import functools

import jax
import jax.numpy as jnp
from jax.experimental import pallas as pl
from jax.experimental.pallas import tpu as pltpu

_BM_MAX = 512  # max row tile for the im2col matmul


def _pair(v):
    return (v, v) if isinstance(v, int) else tuple(v)


def _round_up(x, m):
    return ((x + m - 1) // m) * m


# ---------------------------------------------------------------------------
# Pallas kernels
# ---------------------------------------------------------------------------
def _conv_mm_kernel(a_ref, b_ref, shift_ref, o_ref, *, relu):
    # (bm, K) bf16 x (K, CoutP) bf16 on the MXU with f32 accumulation, then the
    # folded-BN bias (+ ReLU) in f32 on the VPU.
    y = jnp.dot(a_ref[...], b_ref[...], preferred_element_type=jnp.float32)
    y = y + shift_ref[...]
    if relu:
        y = jnp.maximum(y, 0.0)
    o_ref[...] = y


def _maxpool_kernel(xe0, xe1, xe2, xo0, xo1, xo2, o_ref, *, ow):
    # Each ref holds one input row of this batch element, split by column
    # parity: (1, 1, We, C) for even columns, (1, 1, Wo, C) for odd columns.
    # Vertical max over the 3 rows, then horizontal max over window taps
    # {2*ow, 2*ow+1, 2*ow+2}, which become contiguous slices of the parity
    # splits (no strided loads needed).
    ve = jnp.maximum(jnp.maximum(xe0[0, 0, :, :], xe1[0, 0, :, :]),
                     xe2[0, 0, :, :])
    vo = jnp.maximum(jnp.maximum(xo0[0, 0, :, :], xo1[0, 0, :, :]),
                     xo2[0, 0, :, :])
    o_ref[0, 0, :, :] = jnp.maximum(
        jnp.maximum(ve[:ow, :], vo[:ow, :]), ve[1:ow + 1, :])


# ---------------------------------------------------------------------------
# Layer wrappers
# ---------------------------------------------------------------------------
def conv_bn_act(x, layer):
    """Conv2d(bias=False) + folded BatchNorm2d (eval) + optional ReLU, NHWC."""
    w = layer["w"]            # (kh, kw, cin, cout); BN scale already folded in
    shift = layer["shift"]    # (cout,)
    sh, sw = _pair(layer["stride"])
    ph, pw = _pair(layer["padding"])
    relu = layer["relu"]
    kh, kw, cin, cout = w.shape

    x = jnp.pad(x, ((0, 0), (ph, ph), (pw, pw), (0, 0)))
    n, h, wdim, c = x.shape
    oh = (h - kh) // sh + 1
    ow = (wdim - kw) // sw + 1

    # im2col in bf16 (plain-JAX glue).
    # TODO(synk): fold im2col into the kernel via a kh*kw grid axis + VMEM f32
    # accumulator to avoid materializing the patch matrix in HBM at large
    # (299x299) resolutions.
    xb = x.astype(jnp.bfloat16)
    patches = []
    for i in range(kh):
        for j in range(kw):
            patches.append(
                xb[:, i:i + sh * (oh - 1) + 1:sh, j:j + sw * (ow - 1) + 1:sw, :])
    a = jnp.stack(patches, axis=3).reshape(n * oh * ow, kh * kw * c)

    k = kh * kw * cin
    coutp = cout if cout >= 128 else 128          # lane-dense output stores
    b = w.reshape(k, cout).astype(jnp.bfloat16)
    b = jnp.pad(b, ((0, 0), (0, coutp - cout)))
    shift2 = jnp.pad(shift.reshape(1, cout).astype(jnp.float32),
                     ((0, 0), (0, coutp - cout)))

    m = a.shape[0]
    bm = min(_BM_MAX, _round_up(m, 128))
    mp = _round_up(m, bm)
    a = jnp.pad(a, ((0, mp - m), (0, 0)))

    cost = pl.CostEstimate(
        flops=2 * mp * k * coutp,
        transcendentals=0,
        bytes_accessed=int(mp * k * 2 + k * coutp * 2 + coutp * 4
                           + mp * coutp * 4),
    )

    out = pl.pallas_call(
        functools.partial(_conv_mm_kernel, relu=relu),
        out_shape=jax.ShapeDtypeStruct((mp, coutp), jnp.float32),
        grid=(mp // bm,),
        in_specs=[
            pl.BlockSpec((bm, k), lambda i: (i, 0)),
            pl.BlockSpec((k, coutp), lambda i: (0, 0)),
            pl.BlockSpec((1, coutp), lambda i: (0, 0)),
        ],
        out_specs=pl.BlockSpec((bm, coutp), lambda i: (i, 0)),
        compiler_params=pltpu.CompilerParams(
            dimension_semantics=("parallel",)),
        cost_estimate=cost,
    )(a, b, shift2)

    return out[:m, :cout].reshape(n, oh, ow, cout)


def maxpool3x3_s2(x):
    """MaxPool2d(kernel_size=3, stride=2), valid padding, NHWC."""
    n, h, w, c = x.shape
    oh = (h - 3) // 2 + 1
    ow = (w - 3) // 2 + 1

    # Even/odd column split: window tap 2*ow+j becomes a contiguous slice of
    # one of these, so the kernel needs no strided access and the 9x view
    # stack of the previous version disappears.
    xe = x[:, :, 0::2, :]
    xo = x[:, :, 1::2, :]
    we = xe.shape[2]
    wo = xo.shape[2]

    def row_spec(tap, width):
        # H block size is 1, so the block index along H is the input row
        # index directly: output row r needs input rows 2r, 2r+1, 2r+2.
        return pl.BlockSpec((1, 1, width, c),
                            lambda b, r, tap=tap: (b, 2 * r + tap, 0, 0))

    out = pl.pallas_call(
        functools.partial(_maxpool_kernel, ow=ow),
        out_shape=jax.ShapeDtypeStruct((n, oh, ow, c), x.dtype),
        grid=(n, oh),
        in_specs=[row_spec(0, we), row_spec(1, we), row_spec(2, we),
                  row_spec(0, wo), row_spec(1, wo), row_spec(2, wo)],
        out_specs=pl.BlockSpec((1, 1, ow, c), lambda b, r: (b, r, 0, 0)),
        compiler_params=pltpu.CompilerParams(
            dimension_semantics=("parallel", "parallel")),
    )(xe, xe, xe, xo, xo, xo)
    return out


# ---------------------------------------------------------------------------
# Deterministic parameter construction (BasicConv2d = conv + BN + ReLU)
# ---------------------------------------------------------------------------
def _make_bconv(key, cin, cout, ksize, stride=1, padding=0, relu=True):
    kh, kw = _pair(ksize)
    k1, k2, k3, k4, k5 = jax.random.split(key, 5)
    w = 0.1 * jax.random.normal(k1, (kh, kw, cin, cout), jnp.float32)
    gamma = 1.0 + 0.1 * jax.random.normal(k2, (cout,), jnp.float32)
    beta = 0.1 * jax.random.normal(k3, (cout,), jnp.float32)
    rmean = 0.1 * jax.random.normal(k4, (cout,), jnp.float32)
    rvar = 0.5 + jnp.abs(jax.random.normal(k5, (cout,), jnp.float32))
    eps = 1e-5  # nn.BatchNorm2d default
    scale = gamma / jnp.sqrt(rvar + eps)
    shift = beta - rmean * scale
    # Fold the eval-mode BN scale into the conv weights (one-time constant).
    return dict(w=w * scale, shift=shift,
                stride=stride, padding=padding, relu=relu)


def make_stem_params(key):
    keys = iter(jax.random.split(key, 16))
    p = {}
    p["conv1"] = [
        _make_bconv(next(keys), 3, 32, 3, stride=2),
        _make_bconv(next(keys), 32, 32, 3),
        _make_bconv(next(keys), 32, 64, 3, padding=1),
    ]
    p["conv1_branch"] = _make_bconv(next(keys), 64, 96, 3, stride=2)
    p["conv2_short"] = [
        _make_bconv(next(keys), 160, 64, 1),
        _make_bconv(next(keys), 64, 96, 3),
    ]
    p["conv2_long"] = [
        _make_bconv(next(keys), 160, 64, 1),
        _make_bconv(next(keys), 64, 64, (7, 1), padding=(3, 0)),
        _make_bconv(next(keys), 64, 64, (1, 7), padding=(0, 3)),
        _make_bconv(next(keys), 64, 96, 3),
    ]
    p["conv2_branch"] = _make_bconv(next(keys), 192, 192, 3, stride=2)
    return p


def _fuse_pointwise(l1, l2):
    # Both are 1x1 / stride 1 / pad 0 / ReLU convs over the same tensor: run
    # them as one matmul with concatenated output channels (64+64 = 128 lanes).
    w = jnp.concatenate([l1["w"], l2["w"]], axis=-1)
    shift = jnp.concatenate([l1["shift"], l2["shift"]], axis=-1)
    return dict(w=w, shift=shift, stride=1, padding=0, relu=True)


# ---------------------------------------------------------------------------
# Stem forward (matches the PyTorch module's dataflow)
# ---------------------------------------------------------------------------
def stem_forward(x_nchw, params):
    x = jnp.transpose(x_nchw, (0, 2, 3, 1)).astype(jnp.float32)  # NCHW -> NHWC

    for layer in params["conv1"]:
        x = conv_bn_act(x, layer)
    x0 = maxpool3x3_s2(x)                        # conv1_pool_branch
    x1 = conv_bn_act(x, params["conv1_branch"])  # conv1_branch
    x = jnp.concatenate([x0, x1], axis=-1)       # channel concat (torch dim=1)

    # Fused first 1x1 of conv2_short / conv2_long (same input, 160 -> 64+64).
    fused = _fuse_pointwise(params["conv2_short"][0], params["conv2_long"][0])
    split = params["conv2_short"][0]["w"].shape[-1]
    y = conv_bn_act(x, fused)
    xs, xl = y[..., :split], y[..., split:]
    for layer in params["conv2_short"][1:]:
        xs = conv_bn_act(xs, layer)
    for layer in params["conv2_long"][1:]:
        xl = conv_bn_act(xl, layer)
    x = jnp.concatenate([xs, xl], axis=-1)

    x0 = maxpool3x3_s2(x)                        # conv2_pool_branch
    x1 = conv_bn_act(x, params["conv2_branch"])  # conv2_branch
    out = jnp.concatenate([x0, x1], axis=-1)

    return jnp.transpose(out, (0, 3, 1, 2))      # NHWC -> NCHW


if __name__ == "__main__":
    key = jax.random.PRNGKey(0)
    pkey, xkey = jax.random.split(key)
    params = make_stem_params(pkey)

    # Small synthetic input consistent with the module: NCHW, 3 input channels.
    x = jax.random.normal(xkey, (2, 3, 32, 32), jnp.float32)

    out = stem_forward(x, params)
    out = jax.block_until_ready(out)

    # 32x32 -> conv1: 13x13x64 -> concat: 6x6x160 -> concat: 4x4x192 -> 1x1x384
    assert out.shape == (2, 384, 1, 1), out.shape
    assert jnp.isfinite(out).all()
    print("KERNEL_OK")
</pallas_src>

<mosaic_0001>
module attributes {stable_mosaic.version = 11 : i64} {
  func.func @_conv_mm_kernel(%arg0: i32, %arg1: memref<512x27xbf16, #tpu.memory_space<vmem>>, %arg2: memref<27x128xbf16, #tpu.memory_space<vmem>>, %arg3: memref<1x128xf32, #tpu.memory_space<vmem>>, %arg4: memref<512x128xf32, #tpu.memory_space<vmem>>) attributes {dimension_semantics = [#tpu.dimension_semantics<parallel>], iteration_bounds = array<i64: 1>, scalar_prefetch = 0 : i64, scratch_operands = 0 : i64, tpu.core_type = #tpu.core_type<tc>, window_params = [{transform_indices = @transform_0, window_bounds = array<i64: 512, 27>}, {pipeline_mode = #tpu.pipeline_mode<synchronous>, transform_indices = @transform_1, window_bounds = array<i64: 27, 128>}, {pipeline_mode = #tpu.pipeline_mode<synchronous>, transform_indices = @transform_2, window_bounds = array<i64: 1, 128>}, {transform_indices = @transform_3, window_bounds = array<i64: 512, 128>}]} {
    %c0 = arith.constant 0 : index
    %c0_0 = arith.constant 0 : index
    %0 = vector.load %arg1[%c0, %c0_0] : memref<512x27xbf16, #tpu.memory_space<vmem>>, vector<512x27xbf16>
    %c0_1 = arith.constant 0 : index
    %c0_2 = arith.constant 0 : index
    %1 = vector.load %arg2[%c0_1, %c0_2] : memref<27x128xbf16, #tpu.memory_space<vmem>>, vector<27x128xbf16>
    %cst = arith.constant dense<0.000000e+00> : vector<512x128xf32>
    %2 = tpu.matmul %0, %1, %cst {dimension_numbers = #tpu.dot_dimension_numbers<[1], [0], [0], [1], [0, 0, 1, 1], [], []>} : vector<512x27xbf16>, vector<27x128xbf16>, vector<512x128xf32> -> vector<512x128xf32>
    %c0_3 = arith.constant 0 : index
    %c0_4 = arith.constant 0 : index
    %3 = vector.load %arg3[%c0_3, %c0_4] : memref<1x128xf32, #tpu.memory_space<vmem>>, vector<1x128xf32>
    %4 = vector.broadcast %3 : vector<1x128xf32> to vector<512x128xf32>
    %5 = arith.addf %2, %4 : vector<512x128xf32>
    %cst_5 = arith.constant 0.000000e+00 : f32
    %6 = vector.broadcast %cst_5 : f32 to vector<512x128xf32>
    %7 = arith.maximumf %5, %6 : vector<512x128xf32>
    %c0_6 = arith.constant 0 : index
    %c0_7 = arith.constant 0 : index
    %8 = vector.load %arg4[%c0_6, %c0_7] : memref<512x128xf32, #tpu.memory_space<vmem>>, vector<512x128xf32>
    tpu.vector_store %arg4[%c0_6, %c0_7], %7 {strides = array<i32>} : memref<512x128xf32, #tpu.memory_space<vmem>>, vector<512x128xf32>,
    return
  }
  func.func @transform_0(%arg0: i32) -> (i32, i32) {
    %c0_i32 = arith.constant 0 : i32
    %c0_i32_0 = arith.constant 0 : i32
    return %arg0, %c0_i32 : i32, i32
  }
  func.func @transform_1(%arg0: i32) -> (i32, i32) {
    %c0_i32 = arith.constant 0 : i32
    %c0_i32_0 = arith.constant 0 : i32
    %c0_i32_1 = arith.constant 0 : i32
    return %c0_i32, %c0_i32_0 : i32, i32
  }
  func.func @transform_2(%arg0: i32) -> (i32, i32) {
    %c0_i32 = arith.constant 0 : i32
    %c0_i32_0 = arith.constant 0 : i32
    %c0_i32_1 = arith.constant 0 : i32
    return %c0_i32, %c0_i32_0 : i32, i32
  }
  func.func @transform_3(%arg0: i32) -> (i32, i32) {
    %c0_i32 = arith.constant 0 : i32
    %c0_i32_0 = arith.constant 0 : i32
    return %arg0, %c0_i32 : i32, i32
  }
}

</mosaic_0001>

<llo_original>
// kernel: tpu_custom_call.1
$region0: #{tpu_custom_call.1}
  #allocation0 [shape = 'u32[]', space=smem, size = 0x4, offset = 0x4, fixed_abs, tag = 'smem constant byte address 0x4 - core index']
  #allocation1 [shape = 'u32[72,128]{1,0:T(1,128)}', space=vmem, size = 0x9000, scoped, tag = 'internal scratch']
  %s0 = inlined_call_operand.vmem [shape: bf16[512,27], index: 0, kind: input, shape index: {}]
  %s1 = inlined_call_operand.vmem [shape: bf16[27,128], index: 1, kind: input, shape index: {}]
  %s2 = inlined_call_operand.vmem [shape: f32[1,128], index: 2, kind: input, shape index: {}]
  %s3 = inlined_call_operand.hbm [shape: f32[512,128], index: 3, kind: output, shape index: {}]
  %s4 = sld [smem:[#allocation0]]
  $region22: #{tpu_custom_call.1} parent=0
    _
  %s6 = ssub.s32 1, %s4
  %s7 = scalar_select 0, %s6, %s4
  $region1: #{tpu_custom_call.1} parent=0
    #allocation2 [shape = 'u8[262144]{0}', space=vmem, size = 0x40000, scoped, tag = 'output window, operand 0, single buffered']
    #allocation3 [shape = 's32[1]{0}', space=sflag, size = 0x4, scoped, tag = 'scoped memory for tpu_custom_call.1']
    %8 = vsyncpa [#allocation3], 0
    // Predicated region
    $region2: #{tpu_custom_call.1} parent=1 // pred_check
      _
    $region3: #{tpu_custom_call.1} parent=1 // pred_check_branch
      %10 = sbr.rel (0) target = $region5
    $region4: #{tpu_custom_call.1} parent=1 // pred_region
      _
    $region5: #{tpu_custom_call.1} parent=1 // pred_fallthru
      _
    // Predicated region
    $region6: #{tpu_custom_call.1} parent=1 // pred_check
      _
    $region7: #{tpu_custom_call.1} parent=1 // pred_check_branch
      %12 = sbr.rel (0) target = $region9
    $region8: #{tpu_custom_call.1} parent=1 // pred_region
      _
    $region9: #{tpu_custom_call.1} parent=1 // pred_fallthru
      _
    // Predicated region
    $region10: #{tpu_custom_call.1} parent=1 // pred_check
      _
    $region11: #{tpu_custom_call.1} parent=1 // pred_check_branch
      %14 = sbr.rel (0) target = $region13
    $region12: #{tpu_custom_call.1} parent=1 // pred_region
      _
    $region13: #{tpu_custom_call.1} parent=1 // pred_fallthru
      _
    %v16 = vld [vmem:[%s0] sm:$0xf]
    %v17 = vld [vmem:[%s0 + $0x4] sm:$0xf]
    %v18 = vld [vmem:[%s0 + $0x8] sm:$0xf]
    %v19 = vld [vmem:[%s0 + $0xc] sm:$0xf]
    %v20 = vld [vmem:[%s0 + $0x10] sm:$0xf]
    %v21 = vld [vmem:[%s0 + $0x14] sm:$0xf]
    %v22 = vld [vmem:[%s0 + $0x18] sm:$0xf]
    %v23 = vld [vmem:[%s0 + $0x1c] sm:$0xf]
    %v24 = vld [vmem:[%s0 + $0x20] sm:$0xf]
    %v25 = vld [vmem:[%s0 + $0x24] sm:$0xf]
    %v26 = vld [vmem:[%s0 + $0x28] sm:$0xf]
    %v27 = vld [vmem:[%s0 + $0x2c] sm:$0xf]
    %v28 = vld [vmem:[%s0 + $0x30] sm:$0xf]
    %v29 = vld [vmem:[%s0 + $0x34] sm:$0xf]
    %v30 = vld [vmem:[%s0 + $0x38] sm:$0xf]
    %v31 = vld [vmem:[%s0 + $0x3c] sm:$0xf]
    %v32 = vld [vmem:[%s0 + $0x40] sm:$0xf]
    %v33 = vld [vmem:[%s0 + $0x44] sm:$0xf]
    %v34 = vld [vmem:[%s0 + $0x48] sm:$0xf]
    %v35 = vld [vmem:[%s0 + $0x4c] sm:$0xf]
    %v36 = vld [vmem:[%s0 + $0x50] sm:$0xf]
    %v37 = vld [vmem:[%s0 + $0x54] sm:$0xf]
    %v38 = vld [vmem:[%s0 + $0x58] sm:$0xf]
    %v39 = vld [vmem:[%s0 + $0x5c] sm:$0xf]
    %v40 = vld [vmem:[%s0 + $0x60] sm:$0xf]
    %v41 = vld [vmem:[%s0 + $0x64] sm:$0xf]
    %v42 = vld [vmem:[%s0 + $0x68] sm:$0xf]
    %v43 = vld [vmem:[%s0 + $0x6c] sm:$0xf]
    %v44 = vld [vmem:[%s0 + $0x70] sm:$0xf]
    %v45 = vld [vmem:[%s0 + $0x74] sm:$0xf]
    %v46 = vld [vmem:[%s0 + $0x78] sm:$0xf]
    %v47 = vld [vmem:[%s0 + $0x7c] sm:$0xf]
    %v48 = vld [vmem:[%s0 + $0x80] sm:$0xf]
    %v49 = vld [vmem:[%s0 + $0x84] sm:$0xf]
    %v50 = vld [vmem:[%s0 + $0x88] sm:$0xf]
    %v51 = vld [vmem:[%s0 + $0x8c] sm:$0xf]
    %v52 = vld [vmem:[%s0 + $0x90] sm:$0xf]
    %v53 = vld [vmem:[%s0 + $0x94] sm:$0xf]
    %v54 = vld [vmem:[%s0 + $0x98] sm:$0xf]
    %v55 = vld [vmem:[%s0 + $0x9c] sm:$0xf]
    %v56 = vld [vmem:[%s0 + $0xa0] sm:$0xf]
    %v57 = vld [vmem:[%s0 + $0xa4] sm:$0xf]
    %v58 = vld [vmem:[%s0 + $0xa8] sm:$0xf]
    %v59 = vld [vmem:[%s0 + $0xac] sm:$0xf]
    %v60 = vld [vmem:[%s0 + $0xb0] sm:$0xf]
    %v61 = vld [vmem:[%s0 + $0xb4] sm:$0xf]
    %v62 = vld [vmem:[%s0 + $0xb8] sm:$0xf]
    %v63 = vld [vmem:[%s0 + $0xbc] sm:$0xf]
    %v64 = vld [vmem:[%s0 + $0xc0] sm:$0xf]
    %v65 = vld [vmem:[%s0 + $0xc4] sm:$0xf]
    %v66 = vld [vmem:[%s0 + $0xc8] sm:$0xf]
    %v67 = vld [vmem:[%s0 + $0xcc] sm:$0xf]
    %v68 = vld [vmem:[%s0 + $0xd0] sm:$0xf]
    %v69 = vld [vmem:[%s0 + $0xd4] sm:$0xf]
    %v70 = vld [vmem:[%s0 + $0xd8] sm:$0xf]
    %v71 = vld [vmem:[%s0 + $0xdc] sm:$0xf]
    %v72 = vld [vmem:[%s0 + $0xe0] sm:$0xf]
    %v73 = vld [vmem:[%s0 + $0xe4] sm:$0xf]
    %v74 = vld [vmem:[%s0 + $0xe8] sm:$0xf]
    %v75 = vld [vmem:[%s0 + $0xec] sm:$0xf]
    %v76 = vld [vmem:[%s0 + $0xf0] sm:$0xf]
    %v77 = vld [vmem:[%s0 + $0xf4] sm:$0xf]
    %v78 = vld [vmem:[%s0 + $0xf8] sm:$0xf]
    %v79 = vld [vmem:[%s0 + $0xfc] sm:$0xf]
    %v80 = vld [vmem:[%s1] sm:$0xf]
    %v81 = vld [vmem:[%s1 + $0x4] sm:$0xf]
    %v82 = vld [vmem:[%s1 + $0x8] sm:$0xf]
    %v83 = vld [vmem:[%s1 + $0xc] sm:$0x3]
    %v84 = vld [vmem:[%s2] sm:$0x1]
    %v86 = vperm.slane %v84, 0
    %v152 = vunpack.c.l.b16 %v16
    %v153 = vunpack.c.l.b16 %v17
    %v154 = vunpack.c.l.b16 %v18
    %v155 = vunpack.c.l.b16 %v19
    %v156 = vunpack.c.l.b16 %v20
    %v157 = vunpack.c.l.b16 %v21
    %v158 = vunpack.c.l.b16 %v22
    %v159 = vunpack.c.l.b16 %v23
    %v160 = vunpack.c.l.b16 %v24
    %v161 = vunpack.c.l.b16 %v25
    %v162 = vunpack.c.l.b16 %v26
    %v163 = vunpack.c.l.b16 %v27
    %v164 = vunpack.c.l.b16 %v28
    %v165 = vunpack.c.l.b16 %v29
    %v166 = vunpack.c.l.b16 %v30
    %v167 = vunpack.c.l.b16 %v31
    %v168 = vunpack.c.l.b16 %v32
    %v169 = vunpack.c.l.b16 %v33
    %v170 = vunpack.c.l.b16 %v34
    %v171 = vunpack.c.l.b16 %v35
    %v172 = vunpack.c.l.b16 %v36
    %v173 = vunpack.c.l.b16 %v37
    %v174 = vunpack.c.l.b16 %v38
    %v175 = vunpack.c.l.b16 %v39
    %v176 = vunpack.c.l.b16 %v40
    %v177 = vunpack.c.l.b16 %v41
    %v178 = vunpack.c.l.b16 %v42
    %v179 = vunpack.c.l.b16 %v43
    %v180 = vunpack.c.l.b16 %v44
    %v181 = vunpack.c.l.b16 %v45
    %v182 = vunpack.c.l.b16 %v46
    %v183 = vunpack.c.l.b16 %v47
    %v184 = vunpack.c.l.b16 %v48
    %v185 = vunpack.c.l.b16 %v49
    %v186 = vunpack.c.l.b16 %v50
    %v187 = vunpack.c.l.b16 %v51
    %v188 = vunpack.c.l.b16 %v52
    %v189 = vunpack.c.l.b16 %v53
    %v190 = vunpack.c.l.b16 %v54
    %v191 = vunpack.c.l.b16 %v55
    %v192 = vunpack.c.l.b16 %v56
    %v193 = vunpack.c.l.b16 %v57
    %v194 = vunpack.c.l.b16 %v58
    %v195 = vunpack.c.l.b16 %v59
    %v196 = vunpack.c.l.b16 %v60
    %v197 = vunpack.c.l.b16 %v61
    %v198 = vunpack.c.l.b16 %v62
    %v199 = vunpack.c.l.b16 %v63
    %v200 = vunpack.c.l.b16 %v64
    %v201 = vunpack.c.l.b16 %v65
    %v202 = vunpack.c.l.b16 %v66
    %v203 = vunpack.c.l.b16 %v67
    %v204 = vunpack.c.l.b16 %v68
    %v205 = vunpack.c.l.b16 %v69
    %v206 = vunpack.c.l.b16 %v70
    %v207 = vunpack.c.l.b16 %v71
    %v208 = vunpack.c.l.b16 %v72
    %v209 = vunpack.c.l.b16 %v73
    %v210 = vunpack.c.l.b16 %v74
    %v211 = vunpack.c.l.b16 %v75
    %v212 = vunpack.c.l.b16 %v76
    %v213 = vunpack.c.l.b16 %v77
    %v214 = vunpack.c.l.b16 %v78
    %v215 = vunpack.c.l.b16 %v79
    %v216 = vpack.c.b16 %v153, %v152
    %v217 = vpack.c.b16 %v155, %v154
    %v218 = vpack.c.b16 %v157, %v156
    %v219 = vpack.c.b16 %v159, %v158
    %v220 = vpack.c.b16 %v161, %v160
    %v221 = vpack.c.b16 %v163, %v162
    %v222 = vpack.c.b16 %v165, %v164
    %v223 = vpack.c.b16 %v167, %v166
    %v224 = vpack.c.b16 %v169, %v168
    %v225 = vpack.c.b16 %v171, %v170
    %v226 = vpack.c.b16 %v173, %v172
    %v227 = vpack.c.b16 %v175, %v174
    %v228 = vpack.c.b16 %v177, %v176
    %v229 = vpack.c.b16 %v179, %v178
    %v230 = vpack.c.b16 %v181, %v180
    %v231 = vpack.c.b16 %v183, %v182
    %v232 = vpack.c.b16 %v185, %v184
    %v233 = vpack.c.b16 %v187, %v186
    %v234 = vpack.c.b16 %v189, %v188
    %v235 = vpack.c.b16 %v191, %v190
    %v236 = vpack.c.b16 %v193, %v192
    %v237 = vpack.c.b16 %v195, %v194
    %v238 = vpack.c.b16 %v197, %v196
    %v239 = vpack.c.b16 %v199, %v198
    %v240 = vpack.c.b16 %v201, %v200
    %v241 = vpack.c.b16 %v203, %v202
    %v242 = vpack.c.b16 %v205, %v204
    %v243 = vpack.c.b16 %v207, %v206
    %v244 = vpack.c.b16 %v209, %v208
    %v245 = vpack.c.b16 %v211, %v210
    %v246 = vpack.c.b16 %v213, %v212
    %v247 = vpack.c.b16 %v215, %v214
    %v252 = vunpack.c.l.b16 %v80
    %v253 = vunpack.c.l.b16 %v81
    %v254 = vunpack.c.l.b16 %v82
    %v255 = vunpack.c.l.b16 %v83
    %v256 = vpack.c.b16 %v253, %v252
    %v257 = vpack.c.b16 %v255, %v254
    %vm259 = vcmask 220160
    %v261 = vsel %vm259, %v216, 0
    %v264 = vsel %vm259, %v217, 0
    %v267 = vsel %vm259, %v218, 0
    %v270 = vsel %vm259, %v219, 0
    %v273 = vsel %vm259, %v220, 0
    %v276 = vsel %vm259, %v221, 0
    %v279 = vsel %vm259, %v222, 0
    %v282 = vsel %vm259, %v223, 0
    %v285 = vsel %vm259, %v224, 0
    %v288 = vsel %vm259, %v225, 0
    %v291 = vsel %vm259, %v226, 0
    %v294 = vsel %vm259, %v227, 0
    %v297 = vsel %vm259, %v228, 0
    %v300 = vsel %vm259, %v229, 0
    %v303 = vsel %vm259, %v230, 0
    %v306 = vsel %vm259, %v231, 0
    %v309 = vsel %vm259, %v232, 0
    %v312 = vsel %vm259, %v233, 0
    %v315 = vsel %vm259, %v234, 0
    %v318 = vsel %vm259, %v235, 0
    %v321 = vsel %vm259, %v236, 0
    %v324 = vsel %vm259, %v237, 0
    %v327 = vsel %vm259, %v238, 0
    %v330 = vsel %vm259, %v239, 0
    %v333 = vsel %vm259, %v240, 0
    %v336 = vsel %vm259, %v241, 0
    %v339 = vsel %vm259, %v242, 0
    %v342 = vsel %vm259, %v243, 0
    %v345 = vsel %vm259, %v244, 0
    %v348 = vsel %vm259, %v245, 0
    %v351 = vsel %vm259, %v246, 0
    %v354 = vsel %vm259, %v247, 0
    %vm356 = vcmask 1044480
    %vm357 = vcmask 1045504
    %v358 = vsel %vm356, 4294967295, 65535
    %v359 = vsel %vm357, %v358, 0
    %v361 = vand.u32 %v257, %v359
    %363 = vmatpush.bf16.msra.mxu0 0
    %364 = vmatpush.bf16.msra.mxu0 0
    %365 = vmatpush.bf16.msra.mxu0 0
    %366 = vmatpush.bf16.msra.mxu0 0
    %367 = vmatpush.bf16.msra.mxu0 0
    %368 = vmatpush.bf16.msra.mxu0 0
    %369 = vmatpush.bf16.msra.mxu0 %v361
    %370 = vmatpush.bf16.msra.mxu0 %v256
    %371 = vmatmul.bf16.gmra.mxu0 %v261
    %v372 = vpop.f32.mrf.mxu0
    %v373 = vadd.f32 %v86, %v372
    %v374 = vpop.f32.mrf.mxu0
    %v375 = vadd.f32 %v86, %v374
    %376 = vmatmul.bf16.gmra.mxu0 %v264
    %v377 = vpop.f32.mrf.mxu0
    %v378 = vadd.f32 %v86, %v377
    %v379 = vpop.f32.mrf.mxu0
    %v380 = vadd.f32 %v86, %v379
    %381 = vmatmul.bf16.gmra.mxu0 %v267
    %v382 = vpop.f32.mrf.mxu0
    %v383 = vadd.f32 %v86, %v382
    %v384 = vpop.f32.mrf.mxu0
    %v385 = vadd.f32 %v86, %v384
    %386 = vmatmul.bf16.gmra.mxu0 %v270
    %v387 = vpop.f32.mrf.mxu0
    %v388 = vadd.f32 %v86, %v387
    %v389 = vpop.f32.mrf.mxu0
    %v390 = vadd.f32 %v86, %v389
    %391 = vmatmul.bf16.gmra.mxu0 %v273
    %v392 = vpop.f32.mrf.mxu0
    %v393 = vadd.f32 %v86, %v392
    %v394 = vpop.f32.mrf.mxu0
    %v395 = vadd.f32 %v86, %v394
    %396 = vmatmul.bf16.gmra.mxu0 %v276
    %v397 = vpop.f32.mrf.mxu0
    %v398 = vadd.f32 %v86, %v397
    %v399 = vpop.f32.mrf.mxu0
    %v400 = vadd.f32 %v86, %v399
    %401 = vmatmul.bf16.gmra.mxu0 %v279
    %v402 = vpop.f32.mrf.mxu0
    %v403 = vadd.f32 %v86, %v402
    %v404 = vpop.f32.mrf.mxu0
    %v405 = vadd.f32 %v86, %v404
    %406 = vmatmul.bf16.gmra.mxu0 %v282
    %v407 = vpop.f32.mrf.mxu0
    %v408 = vadd.f32 %v86, %v407
    %v409 = vpop.f32.mrf.mxu0
    %v410 = vadd.f32 %v86, %v409
    %411 = vmatmul.bf16.gmra.mxu0 %v285
    %v412 = vpop.f32.mrf.mxu0
    %v413 = vadd.f32 %v86, %v412
    %v414 = vpop.f32.mrf.mxu0
    %v415 = vadd.f32 %v86, %v414
    %416 = vmatmul.bf16.gmra.mxu0 %v288
    %v417 = vpop.f32.mrf.mxu0
    %v418 = vadd.f32 %v86, %v417
    %v419 = vpop.f32.mrf.mxu0
    %v420 = vadd.f32 %v86, %v419
    %421 = vmatmul.bf16.gmra.mxu0 %v291
    %v422 = vpop.f32.mrf.mxu0
    %v423 = vadd.f32 %v86, %v422
    %v424 = vpop.f32.mrf.mxu0
    %v425 = vadd.f32 %v86, %v424
    %426 = vmatmul.bf16.gmra.mxu0 %v294
    %v427 = vpop.f32.mrf.mxu0
    %v428 = vadd.f32 %v86, %v427
    %v429 = vpop.f32.mrf.mxu0
    %v430 = vadd.f32 %v86, %v429
    %431 = vmatmul.bf16.gmra.mxu0 %v297
    %v432 = vpop.f32.mrf.mxu0
    %v433 = vadd.f32 %v86, %v432
    %v434 = vpop.f32.mrf.mxu0
    %v435 = vadd.f32 %v86, %v434
    %436 = vmatmul.bf16.gmra.mxu0 %v300
    %v437 = vpop.f32.mrf.mxu0
    %v438 = vadd.f32 %v86, %v437
    %v439 = vpop.f32.mrf.mxu0
    %v440 = vadd.f32 %v86, %v439
    %441 = vmatmul.bf16.gmra.mxu0 %v303
    %v442 = vpop.f32.mrf.mxu0
    %v443 = vadd.f32 %v86, %v442
    %v444 = vpop.f32.mrf.mxu0
    %v445 = vadd.f32 %v86, %v444
    %446 = vmatmul.bf16.gmra.mxu0 %v306
    %v447 = vpop.f32.mrf.mxu0
    %v448 = vadd.f32 %v86, %v447
    %v449 = vpop.f32.mrf.mxu0
    %v450 = vadd.f32 %v86, %v449
    %451 = vmatmul.bf16.gmra.mxu0 %v309
    %v452 = vpop.f32.mrf.mxu0
    %v453 = vadd.f32 %v86, %v452
    %v454 = vpop.f32.mrf.mxu0
    %v455 = vadd.f32 %v86, %v454
    %456 = vmatmul.bf16.gmra.mxu0 %v312
    %v457 = vpop.f32.mrf.mxu0
    %v458 = vadd.f32 %v86, %v457
    %v459 = vpop.f32.mrf.mxu0
    %v460 = vadd.f32 %v86, %v459
    %461 = vmatmul.bf16.gmra.mxu0 %v315
    %v462 = vpop.f32.mrf.mxu0
    %v463 = vadd.f32 %v86, %v462
    %v464 = vpop.f32.mrf.mxu0
    %v465 = vadd.f32 %v86, %v464
    %466 = vmatmul.bf16.gmra.mxu0 %v318
    %v467 = vpop.f32.mrf.mxu0
    %v468 = vadd.f32 %v86, %v467
    %v469 = vpop.f32.mrf.mxu0
    %v470 = vadd.f32 %v86, %v469
    %471 = vmatmul.bf16.gmra.mxu0 %v321
    %v472 = vpop.f32.mrf.mxu0
    %v473 = vadd.f32 %v86, %v472
    %v474 = vpop.f32.mrf.mxu0
    %v475 = vadd.f32 %v86, %v474
    %476 = vmatmul.bf16.gmra.mxu0 %v324
    %v477 = vpop.f32.mrf.mxu0
    %v478 = vadd.f32 %v86, %v477
    %v479 = vpop.f32.mrf.mxu0
    %v480 = vadd.f32 %v86, %v479
    %481 = vmatmul.bf16.gmra.mxu0 %v327
    %v482 = vpop.f32.mrf.mxu0
    %v483 = vadd.f32 %v86, %v482
    %v484 = vpop.f32.mrf.mxu0
    %v485 = vadd.f32 %v86, %v484
    %486 = vmatmul.bf16.gmra.mxu0 %v330
    %v487 = vpop.f32.mrf.mxu0
    %v488 = vadd.f32 %v86, %v487
    %v489 = vpop.f32.mrf.mxu0
    %v490 = vadd.f32 %v86, %v489
    %491 = vmatmul.bf16.gmra.mxu0 %v333
    %v492 = vpop.f32.mrf.mxu0
    %v493 = vadd.f32 %v86, %v492
    %v494 = vpop.f32.mrf.mxu0
    %v495 = vadd.f32 %v86, %v494
    %496 = vmatmul.bf16.gmra.mxu0 %v336
    %v497 = vpop.f32.mrf.mxu0
    %v498 = vadd.f32 %v86, %v497
    %v499 = vpop.f32.mrf.mxu0
    %v500 = vadd.f32 %v86, %v499
    %501 = vmatmul.bf16.gmra.mxu0 %v339
    %v502 = vpop.f32.mrf.mxu0
    %v503 = vadd.f32 %v86, %v502
    %v504 = vpop.f32.mrf.mxu0
    %v505 = vadd.f32 %v86, %v504
    %506 = vmatmul.bf16.gmra.mxu0 %v342
    %v507 = vpop.f32.mrf.mxu0
    %v508 = vadd.f32 %v86, %v507
    %v509 = vpop.f32.mrf.mxu0
    %v510 = vadd.f32 %v86, %v509
    %511 = vmatmul.bf16.gmra.mxu0 %v345
    %v512 = vpop.f32.mrf.mxu0
    %v513 = vadd.f32 %v86, %v512
    %v514 = vpop.f32.mrf.mxu0
    %v515 = vadd.f32 %v86, %v514
    %516 = vmatmul.bf16.gmra.mxu0 %v348
    %v517 = vpop.f32.mrf.mxu0
    %v518 = vadd.f32 %v86, %v517
    %v519 = vpop.f32.mrf.mxu0
    %v520 = vadd.f32 %v86, %v519
    %521 = vmatmul.bf16.gmra.mxu0 %v351
    %v522 = vpop.f32.mrf.mxu0
    %v523 = vadd.f32 %v86, %v522
    %v524 = vpop.f32.mrf.mxu0
    %v525 = vadd.f32 %v86, %v524
    %526 = vmatmul.bf16.gmra.mxu0 %v354
    %v527 = vpop.f32.mrf.mxu0
    %v528 = vadd.f32 %v86, %v527
    %v529 = vpop.f32.mrf.mxu0
    %v530 = vadd.f32 %v86, %v529
    %531 = vdwg.mxu0
    %v532 = vmax.f32 %v373, 0.0
    %v533 = vmax.f32 %v375, 0.0
    %v534 = vmax.f32 %v378, 0.0
    %v535 = vmax.f32 %v380, 0.0
    %v536 = vmax.f32 %v383, 0.0
    %v537 = vmax.f32 %v385, 0.0
    %v538 = vmax.f32 %v388, 0.0
    %v539 = vmax.f32 %v390, 0.0
    %v540 = vmax.f32 %v393, 0.0
    %v541 = vmax.f32 %v395, 0.0
    %v542 = vmax.f32 %v398, 0.0
    %v543 = vmax.f32 %v400, 0.0
    %v544 = vmax.f32 %v403, 0.0
    %v545 = vmax.f32 %v405, 0.0
    %v546 = vmax.f32 %v408, 0.0
    %v547 = vmax.f32 %v410, 0.0
    %v548 = vmax.f32 %v413, 0.0
    %v549 = vmax.f32 %v415, 0.0
    %v550 = vmax.f32 %v418, 0.0
    %v551 = vmax.f32 %v420, 0.0
    %v552 = vmax.f32 %v423, 0.0
    %v553 = vmax.f32 %v425, 0.0
    %v554 = vmax.f32 %v428, 0.0
    %v555 = vmax.f32 %v430, 0.0
    %v556 = vmax.f32 %v433, 0.0
    %v557 = vmax.f32 %v435, 0.0
    %v558 = vmax.f32 %v438, 0.0
    %v559 = vmax.f32 %v440, 0.0
    %v560 = vmax.f32 %v443, 0.0
    %v561 = vmax.f32 %v445, 0.0
    %v562 = vmax.f32 %v448, 0.0
    %v563 = vmax.f32 %v450, 0.0
    %v564 = vmax.f32 %v453, 0.0
    %v565 = vmax.f32 %v455, 0.0
    %v566 = vmax.f32 %v458, 0.0
    %v567 = vmax.f32 %v460, 0.0
    %v568 = vmax.f32 %v463, 0.0
    %v569 = vmax.f32 %v465, 0.0
    %v570 = vmax.f32 %v468, 0.0
    %v571 = vmax.f32 %v470, 0.0
    %v572 = vmax.f32 %v473, 0.0
    %v573 = vmax.f32 %v475, 0.0
    %v574 = vmax.f32 %v478, 0.0
    %v575 = vmax.f32 %v480, 0.0
    %v576 = vmax.f32 %v483, 0.0
    %v577 = vmax.f32 %v485, 0.0
    %v578 = vmax.f32 %v488, 0.0
    %v579 = vmax.f32 %v490, 0.0
    %v580 = vmax.f32 %v493, 0.0
    %v581 = vmax.f32 %v495, 0.0
    %v582 = vmax.f32 %v498, 0.0
    %v583 = vmax.f32 %v500, 0.0
    %v584 = vmax.f32 %v503, 0.0
    %v585 = vmax.f32 %v505, 0.0
    %v586 = vmax.f32 %v508, 0.0
    %v587 = vmax.f32 %v510, 0.0
    %v588 = vmax.f32 %v513, 0.0
    %v589 = vmax.f32 %v515, 0.0
    %v590 = vmax.f32 %v518, 0.0
    %v591 = vmax.f32 %v520, 0.0
    %v592 = vmax.f32 %v523, 0.0
    %v593 = vmax.f32 %v525, 0.0
    %v594 = vmax.f32 %v528, 0.0
    %v595 = vmax.f32 %v530, 0.0
    %596 = vst [vmem:[#allocation2] sm:$0xff] %v532
    %597 = vst [vmem:[#allocation2 + $0x8] sm:$0xff] %v533
    %598 = vst [vmem:[#allocation2 + $0x10] sm:$0xff] %v534
    %599 = vst [vmem:[#allocation2 + $0x18] sm:$0xff] %v535
    %600 = vst [vmem:[#allocation2 + $0x20] sm:$0xff] %v536
    %601 = vst [vmem:[#allocation2 + $0x28] sm:$0xff] %v537
    %602 = vst [vmem:[#allocation2 + $0x30] sm:$0xff] %v538
    %603 = vst [vmem:[#allocation2 + $0x38] sm:$0xff] %v539
    %604 = vst [vmem:[#allocation2 + $0x40] sm:$0xff] %v540
    %605 = vst [vmem:[#allocation2 + $0x48] sm:$0xff] %v541
    %606 = vst [vmem:[#allocation2 + $0x50] sm:$0xff] %v542
    %607 = vst [vmem:[#allocation2 + $0x58] sm:$0xff] %v543
    %608 = vst [vmem:[#allocation2 + $0x60] sm:$0xff] %v544
    %609 = vst [vmem:[#allocation2 + $0x68] sm:$0xff] %v545
    %610 = vst [vmem:[#allocation2 + $0x70] sm:$0xff] %v546
    %611 = vst [vmem:[#allocation2 + $0x78] sm:$0xff] %v547
    %612 = vst [vmem:[#allocation2 + $0x80] sm:$0xff] %v548
    %613 = vst [vmem:[#allocation2 + $0x88] sm:$0xff] %v549
    %614 = vst [vmem:[#allocation2 + $0x90] sm:$0xff] %v550
    %615 = vst [vmem:[#allocation2 + $0x98] sm:$0xff] %v551
    %616 = vst [vmem:[#allocation2 + $0xa0] sm:$0xff] %v552
    %617 = vst [vmem:[#allocation2 + $0xa8] sm:$0xff] %v553
    %618 = vst [vmem:[#allocation2 + $0xb0] sm:$0xff] %v554
    %619 = vst [vmem:[#allocation2 + $0xb8] sm:$0xff] %v555
    %620 = vst [vmem:[#allocation2 + $0xc0] sm:$0xff] %v556
    %621 = vst [vmem:[#allocation2 + $0xc8] sm:$0xff] %v557
    %622 = vst [vmem:[#allocation2 + $0xd0] sm:$0xff] %v558
    %623 = vst [vmem:[#allocation2 + $0xd8] sm:$0xff] %v559
    %624 = vst [vmem:[#allocation2 + $0xe0] sm:$0xff] %v560
    %625 = vst [vmem:[#allocation2 + $0xe8] sm:$0xff] %v561
    %626 = vst [vmem:[#allocation2 + $0xf0] sm:$0xff] %v562
    %627 = vst [vmem:[#allocation2 + $0xf8] sm:$0xff] %v563
    %628 = vst [vmem:[#allocation2 + $0x100] sm:$0xff] %v564
    %629 = vst [vmem:[#allocation2 + $0x108] sm:$0xff] %v565
    %630 = vst [vmem:[#allocation2 + $0x110] sm:$0xff] %v566
    %631 = vst [vmem:[#allocation2 + $0x118] sm:$0xff] %v567
    %632 = vst [vmem:[#allocation2 + $0x120] sm:$0xff] %v568
    %633 = vst [vmem:[#allocation2 + $0x128] sm:$0xff] %v569
    %634 = vst [vmem:[#allocation2 + $0x130] sm:$0xff] %v570
    %635 = vst [vmem:[#allocation2 + $0x138] sm:$0xff] %v571
    %636 = vst [vmem:[#allocation2 + $0x140] sm:$0xff] %v572
    %637 = vst [vmem:[#allocation2 + $0x148] sm:$0xff] %v573
    %638 = vst [vmem:[#allocation2 + $0x150] sm:$0xff] %v574
    %639 = vst [vmem:[#allocation2 + $0x158] sm:$0xff] %v575
    %640 = vst [vmem:[#allocation2 + $0x160] sm:$0xff] %v576
    %641 = vst [vmem:[#allocation2 + $0x168] sm:$0xff] %v577
    %642 = vst [vmem:[#allocation2 + $0x170] sm:$0xff] %v578
    %643 = vst [vmem:[#allocation2 + $0x178] sm:$0xff] %v579
    %644 = vst [vmem:[#allocation2 + $0x180] sm:$0xff] %v580
    %645 = vst [vmem:[#allocation2 + $0x188] sm:$0xff] %v581
    %646 = vst [vmem:[#allocation2 + $0x190] sm:$0xff] %v582
    %647 = vst [vmem:[#allocation2 + $0x198] sm:$0xff] %v583
    %648 = vst [vmem:[#allocation2 + $0x1a0] sm:$0xff] %v584
    %649 = vst [vmem:[#allocation2 + $0x1a8] sm:$0xff] %v585
    %650 = vst [vmem:[#allocation2 + $0x1b0] sm:$0xff] %v586
    %651 = vst [vmem:[#allocation2 + $0x1b8] sm:$0xff] %v587
    %652 = vst [vmem:[#allocation2 + $0x1c0] sm:$0xff] %v588
    %653 = vst [vmem:[#allocation2 + $0x1c8] sm:$0xff] %v589
    %654 = vst [vmem:[#allocation2 + $0x1d0] sm:$0xff] %v590
    %655 = vst [vmem:[#allocation2 + $0x1d8] sm:$0xff] %v591
    %656 = vst [vmem:[#allocation2 + $0x1e0] sm:$0xff] %v592
    %657 = vst [vmem:[#allocation2 + $0x1e8] sm:$0xff] %v593
    %658 = vst [vmem:[#allocation2 + $0x1f0] sm:$0xff] %v594
    %659 = vst [vmem:[#allocation2 + $0x1f8] sm:$0xff] %v595
    // Predicated region
    $region14: #{tpu_custom_call.1} parent=1 // pred_check
      _
    $region15: #{tpu_custom_call.1} parent=1 // pred_check_branch
      %661 = sbr.rel (0) target = $region17
    $region16: #{tpu_custom_call.1} parent=1 // pred_region
      %663 = vsyncadd [#allocation3], 0
      %s664 = sshll.u32 [#allocation2], 4
      %s665 = int_to_ptr.vmem [resolvable:$true] %s664
      %s666 = sshll.u32 %s3, 4
      %s667 = int_to_ptr.hbm [resolvable:$true] %s666
      %672 = dma.vmem_to_hbm [thread:$0]  %s665, 8192, %s667, [#allocation3], 128, 128, 8
    $region17: #{tpu_custom_call.1} parent=1 // pred_fallthru
      _
    // Predicated region
    $region18: #{tpu_custom_call.1} parent=1 // pred_check
      _
    $region19: #{tpu_custom_call.1} parent=1 // pred_check_branch
      %674 = sbr.rel (0) target = $region21
    $region20: #{tpu_custom_call.1} parent=1 // pred_region
      %676 = dma.done [#allocation3], 8192
    $region21: #{tpu_custom_call.1} parent=1 // pred_fallthru
      _
    %677 = vsyncpa [#allocation3], 1

</llo_original>
